<compile_context>
chip_gen: v7x
topology: tpu7x:2x2x1
jax: 0.10.0
libtpu: 0.0.40
codegen_flags: <defaults>
</compile_context>

<pallas_src>
import math

import jax
import jax.numpy as jnp
from jax.experimental import pallas as pl
from jax.experimental.pallas import tpu as pltpu

HP = 128   # hidden dim (layer_size=100) zero-padded to the lane width
FP = 128   # feature dim zero-padded to the lane width


# ----------------------------------------------------------------------------
# Fused Pallas kernel: one batch-group of graphs per grid step
# ----------------------------------------------------------------------------
def _help_kernel(feat_ref, adj_ref, sel_ref, w_ref, b_ref, out_ref):
    """feat_ref: (1, GN, FP) bf16   adj_ref: (1, GN, GN) bf16 (group block-diag)
    sel_ref:  (1, GP, GN) bf16 (last-node selector rows of adj, zero-padded)
    w_ref:    (7, HP, HP) bf16 slab [gc1..gc4, fc3, fc4, fc5]
    b_ref:    (8, HP)     f32  slab [gc1..gc4, fc3, fc4, fc5, pad]
    out_ref:  (1, GP, HP) f32  (column 0 = per-graph prediction)
    """
    x = feat_ref[0]                          # (GN, FP) bf16
    adj = adj_ref[0]                         # (GN, GN) bf16

    # GCN layers 1-3: relu(adj @ (x @ Wg) + bg), f32 accumulation on the MXU.
    for i in range(3):
        support = jnp.dot(x, w_ref[i], preferred_element_type=jnp.float32)
        h = jnp.dot(adj, support.astype(jnp.bfloat16),
                    preferred_element_type=jnp.float32)
        x = jnp.maximum(h + b_ref[i:i + 1, :], 0.0).astype(jnp.bfloat16)

    # GCN layer 4 fused with last-node pooling: the selector rows are exactly the
    # (N-1)'th adjacency rows of each graph, so this yields the pooled activations.
    support = jnp.dot(x, w_ref[3], preferred_element_type=jnp.float32)
    pooled = jnp.maximum(
        jnp.dot(sel_ref[0], support.astype(jnp.bfloat16),
                preferred_element_type=jnp.float32) + b_ref[3:4, :],
        0.0)                                                    # (GP, HP) f32

    # MLP head: fc3 -> relu -> fc4 -> relu -> fc5.
    h = jnp.maximum(
        jnp.dot(pooled.astype(jnp.bfloat16), w_ref[4],
                preferred_element_type=jnp.float32) + b_ref[4:5, :], 0.0)
    h = jnp.maximum(
        jnp.dot(h.astype(jnp.bfloat16), w_ref[5],
                preferred_element_type=jnp.float32) + b_ref[5:6, :], 0.0)
    out_ref[0] = (jnp.dot(h.astype(jnp.bfloat16), w_ref[6],
                          preferred_element_type=jnp.float32) + b_ref[6:7, :])


# ----------------------------------------------------------------------------
# Host-side wrapper
# ----------------------------------------------------------------------------
def _pad2(x, rows, cols):
    x = x.astype(jnp.float32)
    return jnp.pad(x, ((0, rows - x.shape[0]), (0, cols - x.shape[1])))


def _pad1(b, width):
    return jnp.pad(b.astype(jnp.float32), (0, width - b.shape[0]))


def help_base_forward(adj, feat, params):
    """HELPBase.forward (params=None path, hw_embed_on=False).

    adj: (B, N, N)  feat: (B, N, F)  -> (B, 1)
    """
    B, N, F = feat.shape
    f32, bf16 = jnp.float32, jnp.bfloat16

    # Batch-group size: target ~128 node rows per grid step (bounded VMEM / MXU tile).
    G = max(1, min(B, max(1, 128 // N)))
    B_pad = ((B + G - 1) // G) * G
    num_groups = B_pad // G
    GN = G * N
    GP = max(8, ((G + 7) // 8) * 8)          # sublane-padded rows for pooled/output

    # Pad batch with zero graphs and the feature dim 32 -> 128 (zeros are exact).
    feat_p = jnp.pad(feat.astype(f32), ((0, B_pad - B), (0, 0), (0, FP - F)))
    adj_p = jnp.pad(adj.astype(f32), ((0, B_pad - B), (0, 0), (0, 0)))

    # Group block-diagonal adjacency: (num_groups, GN, GN).
    adj_grp = adj_p.reshape(num_groups, G, N, N)
    eye_g = jnp.eye(G, dtype=f32)
    adj_g = (eye_g[None, :, None, :, None]
             * adj_grp[:, :, :, None, :]).reshape(num_groups, GN, GN)

    # Last-node selector rows (fused into GCN layer 4), padded to GP rows.
    sel_g = jnp.pad(adj_g[:, N - 1::N, :], ((0, 0), (0, GP - G), (0, 0)))

    feat_g = feat_p.reshape(num_groups, GN, FP)

    # Stacked weight / bias slabs (2 DMAs instead of 14 tiny ones).
    w_slab = jnp.stack([
        _pad2(params["gc1_w"], FP, HP),
        _pad2(params["gc2_w"], HP, HP),
        _pad2(params["gc3_w"], HP, HP),
        _pad2(params["gc4_w"], HP, HP),
        _pad2(params["fc3_w"], HP, HP),
        _pad2(params["fc4_w"], HP, HP),
        _pad2(params["fc5_w"], HP, HP),      # (H,1) -> (HP,HP); only col 0 is real
    ])
    b_slab = jnp.stack([
        _pad1(params["gc1_b"], HP),
        _pad1(params["gc2_b"], HP),
        _pad1(params["gc3_b"], HP),
        _pad1(params["gc4_b"], HP),
        _pad1(params["fc3_b"], HP),
        _pad1(params["fc4_b"], HP),
        _pad1(params["fc5_b"], HP),
        jnp.zeros((HP,), f32),               # pad row -> (8, HP) full sublane tile
    ])

    # bf16 on the MXU; biases stay f32 (added to the f32 accumulators).
    feat_g = feat_g.astype(bf16)
    adj_g = adj_g.astype(bf16)
    sel_g = sel_g.astype(bf16)
    w_slab = w_slab.astype(bf16)

    flops_per_group = (
        2 * GN * FP * HP + 2 * GN * GN * HP               # layer 1
        + 2 * (2 * GN * HP * HP + 2 * GN * GN * HP)       # layers 2-3
        + 2 * GN * HP * HP + 2 * GP * GN * HP             # layer 4 + pooling
        + 3 * (2 * GP * HP * HP))                         # fc3 / fc4 / fc5
    bytes_accessed = (feat_g.size * 2 + adj_g.size * 2 + sel_g.size * 2
                      + w_slab.size * 2 + b_slab.size * 4
                      + num_groups * GP * HP * 4)

    out = pl.pallas_call(
        _help_kernel,
        grid=(num_groups,),
        in_specs=[
            pl.BlockSpec((1, GN, FP), lambda g: (g, 0, 0)),   # feat group
            pl.BlockSpec((1, GN, GN), lambda g: (g, 0, 0)),   # adjacency group
            pl.BlockSpec((1, GP, GN), lambda g: (g, 0, 0)),   # last-node selector
            pl.BlockSpec((7, HP, HP), lambda g: (0, 0, 0)),   # weight slab (replicated)
            pl.BlockSpec((8, HP), lambda g: (0, 0)),          # bias slab (replicated)
        ],
        out_specs=pl.BlockSpec((1, GP, HP), lambda g: (g, 0, 0)),
        out_shape=jax.ShapeDtypeStruct((num_groups, GP, HP), jnp.float32),
        compiler_params=pltpu.CompilerParams(
            dimension_semantics=("parallel",)),
        cost_estimate=pl.CostEstimate(flops=num_groups * flops_per_group,
                                      transcendentals=0,
                                      bytes_accessed=bytes_accessed),
    )(feat_g, adj_g, sel_g, w_slab, b_slab)

    # Real prediction is column 0 of the first G rows of each group.
    return out[:, :G, 0].reshape(B_pad, 1)[:B]


# ----------------------------------------------------------------------------
# Parameter init mirroring HELPBase.__init__ / init_weights shapes
# ----------------------------------------------------------------------------
def init_params(key, nfeat, layer_size=100):
    keys = jax.random.split(key, 16)
    stdv = 1.0 / math.sqrt(layer_size)
    params = {}
    in_dims = [nfeat, layer_size, layer_size, layer_size]
    for i in range(4):
        params[f"gc{i+1}_w"] = jax.random.uniform(
            keys[2 * i], (in_dims[i], layer_size), jnp.float32, -0.05, 0.05)
        params[f"gc{i+1}_b"] = jax.random.uniform(
            keys[2 * i + 1], (layer_size,), jnp.float32, -stdv, stdv)
    hfeat = layer_size
    lim = 1.0 / math.sqrt(hfeat)
    params["fc3_w"] = jax.random.uniform(keys[8], (hfeat, hfeat), jnp.float32, -lim, lim)
    params["fc3_b"] = jax.random.uniform(keys[9], (hfeat,), jnp.float32, -lim, lim)
    params["fc4_w"] = jax.random.uniform(keys[10], (hfeat, hfeat), jnp.float32, -lim, lim)
    params["fc4_b"] = jax.random.uniform(keys[11], (hfeat,), jnp.float32, -lim, lim)
    params["fc5_w"] = jax.random.uniform(keys[12], (hfeat, 1), jnp.float32, -lim, lim)
    params["fc5_b"] = jax.random.uniform(keys[13], (1,), jnp.float32, -lim, lim)
    return params


# ----------------------------------------------------------------------------
# Main
# ----------------------------------------------------------------------------
if __name__ == "__main__":
    B, N, nfeat = 2, 8, 32          # batch of graphs, 8 nodes each, 32-dim features
    key = jax.random.PRNGKey(0)
    k_adj, k_feat, k_params = jax.random.split(key, 3)

    adj = jax.random.uniform(k_adj, (B, N, N), jnp.float32)
    feat = jax.random.uniform(k_feat, (B, N, nfeat), jnp.float32)
    params = init_params(k_params, nfeat, layer_size=100)

    fwd = jax.jit(help_base_forward)
    out = fwd(adj, feat, params)
    jax.block_until_ready(out)

    # Pure-JAX f32 reference of the original (unpadded) semantics.
    def ref_forward(adj, feat, p):
        out = feat
        for i in range(1, 5):
            support = jnp.einsum("bnf,fh->bnh", out, p[f"gc{i}_w"])
            out = jnp.einsum("bnm,bmh->bnh", adj, support) + p[f"gc{i}_b"]
            out = jnp.maximum(out, 0.0)
        out = out[:, -1, :]
        out = jnp.maximum(out @ p["fc3_w"] + p["fc3_b"], 0.0)
        out = jnp.maximum(out @ p["fc4_w"] + p["fc4_b"], 0.0)
        return out @ p["fc5_w"] + p["fc5_b"]

    ref = ref_forward(adj, feat, params)
    assert out.shape == (B, 1), out.shape
    # bf16 MXU path: tolerance loosened vs. the f32 reference (per review).
    assert jnp.allclose(out, ref, atol=3e-2, rtol=3e-2), (out, ref)
    print("KERNEL_OK")
</pallas_src>

<mosaic_0001>
module attributes {stable_mosaic.version = 11 : i64} {
  func.func @_help_kernel(%arg0: i32, %arg1: memref<1x16x128xbf16, #tpu.memory_space<vmem>>, %arg2: memref<1x16x16xbf16, #tpu.memory_space<vmem>>, %arg3: memref<1x8x16xbf16, #tpu.memory_space<vmem>>, %arg4: memref<7x128x128xbf16, #tpu.memory_space<vmem>>, %arg5: memref<8x128xf32, #tpu.memory_space<vmem>>, %arg6: memref<1x8x128xf32, #tpu.memory_space<vmem>>) attributes {dimension_semantics = [#tpu.dimension_semantics<parallel>], iteration_bounds = array<i64: 1>, scalar_prefetch = 0 : i64, scratch_operands = 0 : i64, tpu.core_type = #tpu.core_type<tc>, window_params = [{transform_indices = @transform_0, window_bounds = array<i64: 1, 16, 128>}, {transform_indices = @transform_1, window_bounds = array<i64: 1, 16, 16>}, {transform_indices = @transform_2, window_bounds = array<i64: 1, 8, 16>}, {pipeline_mode = #tpu.pipeline_mode<synchronous>, transform_indices = @transform_3, window_bounds = array<i64: 7, 128, 128>}, {pipeline_mode = #tpu.pipeline_mode<synchronous>, transform_indices = @transform_4, window_bounds = array<i64: 8, 128>}, {transform_indices = @transform_5, window_bounds = array<i64: 1, 8, 128>}]} {
    %c0 = arith.constant 0 : index
    %c0_0 = arith.constant 0 : index
    %c0_1 = arith.constant 0 : index
    %0 = vector.load %arg1[%c0, %c0_0, %c0_1] : memref<1x16x128xbf16, #tpu.memory_space<vmem>>, vector<1x16x128xbf16>
    %1 = vector.shape_cast %0 : vector<1x16x128xbf16> to vector<16x128xbf16>
    %c0_2 = arith.constant 0 : index
    %c0_3 = arith.constant 0 : index
    %c0_4 = arith.constant 0 : index
    %2 = vector.load %arg2[%c0_2, %c0_3, %c0_4] : memref<1x16x16xbf16, #tpu.memory_space<vmem>>, vector<1x16x16xbf16>
    %3 = vector.shape_cast %2 : vector<1x16x16xbf16> to vector<16x16xbf16>
    %c0_5 = arith.constant 0 : index
    %c0_6 = arith.constant 0 : index
    %c0_7 = arith.constant 0 : index
    %4 = vector.load %arg4[%c0_5, %c0_6, %c0_7] : memref<7x128x128xbf16, #tpu.memory_space<vmem>>, vector<1x128x128xbf16>
    %5 = vector.shape_cast %4 : vector<1x128x128xbf16> to vector<128x128xbf16>
    %cst = arith.constant dense<0.000000e+00> : vector<16x128xf32>
    %6 = tpu.matmul %1, %5, %cst {dimension_numbers = #tpu.dot_dimension_numbers<[1], [0], [0], [1], [0, 0, 1, 1], [], []>} : vector<16x128xbf16>, vector<128x128xbf16>, vector<16x128xf32> -> vector<16x128xf32>
    %7 = arith.truncf %6 : vector<16x128xf32> to vector<16x128xbf16>
    %cst_8 = arith.constant dense<0.000000e+00> : vector<16x128xf32>
    %8 = tpu.matmul %3, %7, %cst_8 {dimension_numbers = #tpu.dot_dimension_numbers<[1], [0], [0], [1], [0, 0, 1, 1], [], []>} : vector<16x16xbf16>, vector<16x128xbf16>, vector<16x128xf32> -> vector<16x128xf32>
    %c0_9 = arith.constant 0 : index
    %c0_10 = arith.constant 0 : index
    %9 = vector.load %arg5[%c0_9, %c0_10] : memref<8x128xf32, #tpu.memory_space<vmem>>, vector<1x128xf32>
    %10 = vector.broadcast %9 : vector<1x128xf32> to vector<16x128xf32>
    %11 = arith.addf %8, %10 : vector<16x128xf32>
    %cst_11 = arith.constant 0.000000e+00 : f32
    %12 = vector.broadcast %cst_11 : f32 to vector<16x128xf32>
    %13 = arith.maximumf %11, %12 : vector<16x128xf32>
    %14 = arith.truncf %13 : vector<16x128xf32> to vector<16x128xbf16>
    %c1 = arith.constant 1 : index
    %c0_12 = arith.constant 0 : index
    %c0_13 = arith.constant 0 : index
    %15 = vector.load %arg4[%c1, %c0_12, %c0_13] : memref<7x128x128xbf16, #tpu.memory_space<vmem>>, vector<1x128x128xbf16>
    %16 = vector.shape_cast %15 : vector<1x128x128xbf16> to vector<128x128xbf16>
    %cst_14 = arith.constant dense<0.000000e+00> : vector<16x128xf32>
    %17 = tpu.matmul %14, %16, %cst_14 {dimension_numbers = #tpu.dot_dimension_numbers<[1], [0], [0], [1], [0, 0, 1, 1], [], []>} : vector<16x128xbf16>, vector<128x128xbf16>, vector<16x128xf32> -> vector<16x128xf32>
    %18 = arith.truncf %17 : vector<16x128xf32> to vector<16x128xbf16>
    %cst_15 = arith.constant dense<0.000000e+00> : vector<16x128xf32>
    %19 = tpu.matmul %3, %18, %cst_15 {dimension_numbers = #tpu.dot_dimension_numbers<[1], [0], [0], [1], [0, 0, 1, 1], [], []>} : vector<16x16xbf16>, vector<16x128xbf16>, vector<16x128xf32> -> vector<16x128xf32>
    %c1_16 = arith.constant 1 : index
    %c0_17 = arith.constant 0 : index
    %20 = vector.load %arg5[%c1_16, %c0_17] : memref<8x128xf32, #tpu.memory_space<vmem>>, vector<1x128xf32>
    %21 = vector.broadcast %20 : vector<1x128xf32> to vector<16x128xf32>
    %22 = arith.addf %19, %21 : vector<16x128xf32>
    %cst_18 = arith.constant 0.000000e+00 : f32
    %23 = vector.broadcast %cst_18 : f32 to vector<16x128xf32>
    %24 = arith.maximumf %22, %23 : vector<16x128xf32>
    %25 = arith.truncf %24 : vector<16x128xf32> to vector<16x128xbf16>
    %c2 = arith.constant 2 : index
    %c0_19 = arith.constant 0 : index
    %c0_20 = arith.constant 0 : index
    %26 = vector.load %arg4[%c2, %c0_19, %c0_20] : memref<7x128x128xbf16, #tpu.memory_space<vmem>>, vector<1x128x128xbf16>
    %27 = vector.shape_cast %26 : vector<1x128x128xbf16> to vector<128x128xbf16>
    %cst_21 = arith.constant dense<0.000000e+00> : vector<16x128xf32>
    %28 = tpu.matmul %25, %27, %cst_21 {dimension_numbers = #tpu.dot_dimension_numbers<[1], [0], [0], [1], [0, 0, 1, 1], [], []>} : vector<16x128xbf16>, vector<128x128xbf16>, vector<16x128xf32> -> vector<16x128xf32>
    %29 = arith.truncf %28 : vector<16x128xf32> to vector<16x128xbf16>
    %cst_22 = arith.constant dense<0.000000e+00> : vector<16x128xf32>
    %30 = tpu.matmul %3, %29, %cst_22 {dimension_numbers = #tpu.dot_dimension_numbers<[1], [0], [0], [1], [0, 0, 1, 1], [], []>} : vector<16x16xbf16>, vector<16x128xbf16>, vector<16x128xf32> -> vector<16x128xf32>
    %c2_23 = arith.constant 2 : index
    %c0_24 = arith.constant 0 : index
    %31 = vector.load %arg5[%c2_23, %c0_24] : memref<8x128xf32, #tpu.memory_space<vmem>>, vector<1x128xf32>
    %32 = vector.broadcast %31 : vector<1x128xf32> to vector<16x128xf32>
    %33 = arith.addf %30, %32 : vector<16x128xf32>
    %cst_25 = arith.constant 0.000000e+00 : f32
    %34 = vector.broadcast %cst_25 : f32 to vector<16x128xf32>
    %35 = arith.maximumf %33, %34 : vector<16x128xf32>
    %36 = arith.truncf %35 : vector<16x128xf32> to vector<16x128xbf16>
    %c3 = arith.constant 3 : index
    %c0_26 = arith.constant 0 : index
    %c0_27 = arith.constant 0 : index
    %37 = vector.load %arg4[%c3, %c0_26, %c0_27] : memref<7x128x128xbf16, #tpu.memory_space<vmem>>, vector<1x128x128xbf16>
    %38 = vector.shape_cast %37 : vector<1x128x128xbf16> to vector<128x128xbf16>
    %cst_28 = arith.constant dense<0.000000e+00> : vector<16x128xf32>
    %39 = tpu.matmul %36, %38, %cst_28 {dimension_numbers = #tpu.dot_dimension_numbers<[1], [0], [0], [1], [0, 0, 1, 1], [], []>} : vector<16x128xbf16>, vector<128x128xbf16>, vector<16x128xf32> -> vector<16x128xf32>
    %c0_29 = arith.constant 0 : index
    %c0_30 = arith.constant 0 : index
    %c0_31 = arith.constant 0 : index
    %40 = vector.load %arg3[%c0_29, %c0_30, %c0_31] : memref<1x8x16xbf16, #tpu.memory_space<vmem>>, vector<1x8x16xbf16>
    %41 = vector.shape_cast %40 : vector<1x8x16xbf16> to vector<8x16xbf16>
    %42 = arith.truncf %39 : vector<16x128xf32> to vector<16x128xbf16>
    %cst_32 = arith.constant dense<0.000000e+00> : vector<8x128xf32>
    %43 = tpu.matmul %41, %42, %cst_32 {dimension_numbers = #tpu.dot_dimension_numbers<[1], [0], [0], [1], [0, 0, 1, 1], [], []>} : vector<8x16xbf16>, vector<16x128xbf16>, vector<8x128xf32> -> vector<8x128xf32>
    %c3_33 = arith.constant 3 : index
    %c0_34 = arith.constant 0 : index
    %44 = vector.load %arg5[%c3_33, %c0_34] : memref<8x128xf32, #tpu.memory_space<vmem>>, vector<1x128xf32>
    %45 = vector.broadcast %44 : vector<1x128xf32> to vector<8x128xf32>
    %46 = arith.addf %43, %45 : vector<8x128xf32>
    %cst_35 = arith.constant 0.000000e+00 : f32
    %47 = vector.broadcast %cst_35 : f32 to vector<8x128xf32>
    %48 = arith.maximumf %46, %47 : vector<8x128xf32>
    %49 = arith.truncf %48 : vector<8x128xf32> to vector<8x128xbf16>
    %c4 = arith.constant 4 : index
    %c0_36 = arith.constant 0 : index
    %c0_37 = arith.constant 0 : index
    %50 = vector.load %arg4[%c4, %c0_36, %c0_37] : memref<7x128x128xbf16, #tpu.memory_space<vmem>>, vector<1x128x128xbf16>
    %51 = vector.shape_cast %50 : vector<1x128x128xbf16> to vector<128x128xbf16>
    %cst_38 = arith.constant dense<0.000000e+00> : vector<8x128xf32>
    %52 = tpu.matmul %49, %51, %cst_38 {dimension_numbers = #tpu.dot_dimension_numbers<[1], [0], [0], [1], [0, 0, 1, 1], [], []>} : vector<8x128xbf16>, vector<128x128xbf16>, vector<8x128xf32> -> vector<8x128xf32>
    %c4_39 = arith.constant 4 : index
    %c0_40 = arith.constant 0 : index
    %53 = vector.load %arg5[%c4_39, %c0_40] : memref<8x128xf32, #tpu.memory_space<vmem>>, vector<1x128xf32>
    %54 = vector.broadcast %53 : vector<1x128xf32> to vector<8x128xf32>
    %55 = arith.addf %52, %54 : vector<8x128xf32>
    %cst_41 = arith.constant 0.000000e+00 : f32
    %56 = vector.broadcast %cst_41 : f32 to vector<8x128xf32>
    %57 = arith.maximumf %55, %56 : vector<8x128xf32>
    %58 = arith.truncf %57 : vector<8x128xf32> to vector<8x128xbf16>
    %c5 = arith.constant 5 : index
    %c0_42 = arith.constant 0 : index
    %c0_43 = arith.constant 0 : index
    %59 = vector.load %arg4[%c5, %c0_42, %c0_43] : memref<7x128x128xbf16, #tpu.memory_space<vmem>>, vector<1x128x128xbf16>
    %60 = vector.shape_cast %59 : vector<1x128x128xbf16> to vector<128x128xbf16>
    %cst_44 = arith.constant dense<0.000000e+00> : vector<8x128xf32>
    %61 = tpu.matmul %58, %60, %cst_44 {dimension_numbers = #tpu.dot_dimension_numbers<[1], [0], [0], [1], [0, 0, 1, 1], [], []>} : vector<8x128xbf16>, vector<128x128xbf16>, vector<8x128xf32> -> vector<8x128xf32>
    %c5_45 = arith.constant 5 : index
    %c0_46 = arith.constant 0 : index
    %62 = vector.load %arg5[%c5_45, %c0_46] : memref<8x128xf32, #tpu.memory_space<vmem>>, vector<1x128xf32>
    %63 = vector.broadcast %62 : vector<1x128xf32> to vector<8x128xf32>
    %64 = arith.addf %61, %63 : vector<8x128xf32>
    %cst_47 = arith.constant 0.000000e+00 : f32
    %65 = vector.broadcast %cst_47 : f32 to vector<8x128xf32>
    %66 = arith.maximumf %64, %65 : vector<8x128xf32>
    %67 = arith.truncf %66 : vector<8x128xf32> to vector<8x128xbf16>
    %c6 = arith.constant 6 : index
    %c0_48 = arith.constant 0 : index
    %c0_49 = arith.constant 0 : index
    %68 = vector.load %arg4[%c6, %c0_48, %c0_49] : memref<7x128x128xbf16, #tpu.memory_space<vmem>>, vector<1x128x128xbf16>
    %69 = vector.shape_cast %68 : vector<1x128x128xbf16> to vector<128x128xbf16>
    %cst_50 = arith.constant dense<0.000000e+00> : vector<8x128xf32>
    %70 = tpu.matmul %67, %69, %cst_50 {dimension_numbers = #tpu.dot_dimension_numbers<[1], [0], [0], [1], [0, 0, 1, 1], [], []>} : vector<8x128xbf16>, vector<128x128xbf16>, vector<8x128xf32> -> vector<8x128xf32>
    %c6_51 = arith.constant 6 : index
    %c0_52 = arith.constant 0 : index
    %71 = vector.load %arg5[%c6_51, %c0_52] : memref<8x128xf32, #tpu.memory_space<vmem>>, vector<1x128xf32>
    %72 = vector.broadcast %71 : vector<1x128xf32> to vector<8x128xf32>
    %73 = arith.addf %70, %72 : vector<8x128xf32>
    %c0_53 = arith.constant 0 : index
    %c0_54 = arith.constant 0 : index
    %c0_55 = arith.constant 0 : index
    %74 = vector.load %arg6[%c0_53, %c0_54, %c0_55] : memref<1x8x128xf32, #tpu.memory_space<vmem>>, vector<1x8x128xf32>
    %75 = vector.shape_cast %74 : vector<1x8x128xf32> to vector<8x128xf32>
    %76 = vector.shape_cast %73 : vector<8x128xf32> to vector<1x8x128xf32>
    tpu.vector_store %arg6[%c0_53, %c0_54, %c0_55], %76 {strides = array<i32>} : memref<1x8x128xf32, #tpu.memory_space<vmem>>, vector<1x8x128xf32>,
    return
  }
  func.func @transform_0(%arg0: i32) -> (i32, i32, i32) {
    %c0_i32 = arith.constant 0 : i32
    %c0_i32_0 = arith.constant 0 : i32
    %c0_i32_1 = arith.constant 0 : i32
    return %arg0, %c0_i32, %c0_i32_0 : i32, i32, i32
  }
  func.func @transform_1(%arg0: i32) -> (i32, i32, i32) {
    %c0_i32 = arith.constant 0 : i32
    %c0_i32_0 = arith.constant 0 : i32
    %c0_i32_1 = arith.constant 0 : i32
    return %arg0, %c0_i32, %c0_i32_0 : i32, i32, i32
  }
  func.func @transform_2(%arg0: i32) -> (i32, i32, i32) {
    %c0_i32 = arith.constant 0 : i32
    %c0_i32_0 = arith.constant 0 : i32
    %c0_i32_1 = arith.constant 0 : i32
    return %arg0, %c0_i32, %c0_i32_0 : i32, i32, i32
  }
  func.func @transform_3(%arg0: i32) -> (i32, i32, i32) {
    %c0_i32 = arith.constant 0 : i32
    %c0_i32_0 = arith.constant 0 : i32
    %c0_i32_1 = arith.constant 0 : i32
    %c0_i32_2 = arith.constant 0 : i32
    return %c0_i32, %c0_i32_0, %c0_i32_1 : i32, i32, i32
  }
  func.func @transform_4(%arg0: i32) -> (i32, i32) {
    %c0_i32 = arith.constant 0 : i32
    %c0_i32_0 = arith.constant 0 : i32
    %c0_i32_1 = arith.constant 0 : i32
    return %c0_i32, %c0_i32_0 : i32, i32
  }
  func.func @transform_5(%arg0: i32) -> (i32, i32, i32) {
    %c0_i32 = arith.constant 0 : i32
    %c0_i32_0 = arith.constant 0 : i32
    %c0_i32_1 = arith.constant 0 : i32
    return %arg0, %c0_i32, %c0_i32_0 : i32, i32, i32
  }
}

</mosaic_0001>

<llo_original>
// kernel: help_base_forward.1
$region0: #{help_base_forward.1}
  #allocation0 [shape = 'u32[]', space=smem, size = 0x4, offset = 0x4, fixed_abs, tag = 'smem constant byte address 0x4 - core index']
  #allocation1 [shape = 'u32[144,128]{1,0:T(1,128)}', space=vmem, size = 0x12000, scoped, tag = 'internal scratch']
  %s0 = inlined_call_operand.vmem [shape: bf16[1,16,128], index: 0, kind: input, shape index: {}]
  %s1 = inlined_call_operand.vmem [shape: bf16[1,16,16], index: 1, kind: input, shape index: {}]
  %s2 = inlined_call_operand.vmem [shape: bf16[1,8,16], index: 2, kind: input, shape index: {}]
  %s3 = inlined_call_operand.vmem [shape: bf16[7,128,128], index: 3, kind: input, shape index: {}]
  %s4 = inlined_call_operand.vmem [shape: f32[8,128], index: 4, kind: input, shape index: {}]
  %s5 = inlined_call_operand.vmem [shape: f32[1,8,128], index: 5, kind: output, shape index: {}]
  %s6 = sld [smem:[#allocation0]]
  $region30: #{help_base_forward.1} parent=0
    _
  %s8 = ssub.s32 1, %s6
  %s9 = scalar_select 0, %s8, %s6
  // Predicated region
  $region2: #{help_base_forward.1} parent=0 // pred_check
    _
  $region3: #{help_base_forward.1} parent=0 // pred_check_branch
    %11 = sbr.rel (0) target = $region5
  $region4: #{help_base_forward.1} parent=0 // pred_region
    _
  $region5: #{help_base_forward.1} parent=0 // pred_fallthru
    _
  // Predicated region
  $region6: #{help_base_forward.1} parent=0 // pred_check
    _
  $region7: #{help_base_forward.1} parent=0 // pred_check_branch
    %13 = sbr.rel (0) target = $region9
  $region8: #{help_base_forward.1} parent=0 // pred_region
    _
  $region9: #{help_base_forward.1} parent=0 // pred_fallthru
    _
  // Predicated region
  $region10: #{help_base_forward.1} parent=0 // pred_check
    _
  $region11: #{help_base_forward.1} parent=0 // pred_check_branch
    %15 = sbr.rel (0) target = $region13
  $region12: #{help_base_forward.1} parent=0 // pred_region
    _
  $region13: #{help_base_forward.1} parent=0 // pred_fallthru
    _
  // Predicated region
  $region14: #{help_base_forward.1} parent=0 // pred_check
    _
  $region15: #{help_base_forward.1} parent=0 // pred_check_branch
    %17 = sbr.rel (0) target = $region17
  $region16: #{help_base_forward.1} parent=0 // pred_region
    _
  $region17: #{help_base_forward.1} parent=0 // pred_fallthru
    _
  // Predicated region
  $region18: #{help_base_forward.1} parent=0 // pred_check
    _
  $region19: #{help_base_forward.1} parent=0 // pred_check_branch
    %19 = sbr.rel (0) target = $region21
  $region20: #{help_base_forward.1} parent=0 // pred_region
    _
  $region21: #{help_base_forward.1} parent=0 // pred_fallthru
    _
  %v21 = vld [vmem:[%s0] sm:$0xf]
  %v22 = vld [vmem:[%s0 + $0x4] sm:$0xf]
  %v23 = vld [vmem:[%s1] sm:$0xf]
  %v24 = vld [vmem:[%s1 + $0x4] sm:$0xf]
  %v25 = vld [vmem:[%s3] sm:$0xf]
  %v26 = vld [vmem:[%s3 + $0x4] sm:$0xf]
  %v27 = vld [vmem:[%s3 + $0x8] sm:$0xf]
  %v28 = vld [vmem:[%s3 + $0xc] sm:$0xf]
  %v29 = vld [vmem:[%s3 + $0x10] sm:$0xf]
  %v30 = vld [vmem:[%s3 + $0x14] sm:$0xf]
  %v31 = vld [vmem:[%s3 + $0x18] sm:$0xf]
  %v32 = vld [vmem:[%s3 + $0x1c] sm:$0xf]
  %v33 = vld [vmem:[%s3 + $0x20] sm:$0xf]
  %v34 = vld [vmem:[%s3 + $0x24] sm:$0xf]
  %v35 = vld [vmem:[%s3 + $0x28] sm:$0xf]
  %v36 = vld [vmem:[%s3 + $0x2c] sm:$0xf]
  %v37 = vld [vmem:[%s3 + $0x30] sm:$0xf]
  %v38 = vld [vmem:[%s3 + $0x34] sm:$0xf]
  %v39 = vld [vmem:[%s3 + $0x38] sm:$0xf]
  %v40 = vld [vmem:[%s3 + $0x3c] sm:$0xf]
  %v43 = vunpack.c.l.b16 %v21
  %v44 = vunpack.c.l.b16 %v22
  %v45 = vpack.c.b16 %v44, %v43
  %v63 = vunpack.c.l.b16 %v25
  %v64 = vunpack.c.l.b16 %v26
  %v65 = vunpack.c.l.b16 %v27
  %v66 = vunpack.c.l.b16 %v28
  %v67 = vunpack.c.l.b16 %v29
  %v68 = vunpack.c.l.b16 %v30
  %v69 = vunpack.c.l.b16 %v31
  %v70 = vunpack.c.l.b16 %v32
  %v71 = vunpack.c.l.b16 %v33
  %v72 = vunpack.c.l.b16 %v34
  %v73 = vunpack.c.l.b16 %v35
  %v74 = vunpack.c.l.b16 %v36
  %v75 = vunpack.c.l.b16 %v37
  %v76 = vunpack.c.l.b16 %v38
  %v77 = vunpack.c.l.b16 %v39
  %v78 = vunpack.c.l.b16 %v40
  %v79 = vpack.c.b16 %v64, %v63
  %v80 = vpack.c.b16 %v66, %v65
  %v81 = vpack.c.b16 %v68, %v67
  %v82 = vpack.c.b16 %v70, %v69
  %v83 = vpack.c.b16 %v72, %v71
  %v84 = vpack.c.b16 %v74, %v73
  %v85 = vpack.c.b16 %v76, %v75
  %v86 = vpack.c.b16 %v78, %v77
  %95 = vmatprep.subr.bf16.mxu0 0
  %96 = vmatpush1.bf16.msra.mxu0 %v79
  %97 = vmatprep.subr.bf16.mxu0 0
  %98 = vmatpush1.bf16.msra.mxu0 %v80
  %99 = vmatprep.subr.bf16.mxu0 0
  %100 = vmatpush1.bf16.msra.mxu0 %v81
  %101 = vmatprep.subr.bf16.mxu0 0
  %102 = vmatpush1.bf16.msra.mxu0 %v82
  %103 = vmatprep.subr.bf16.mxu0 0
  %104 = vmatpush1.bf16.msra.mxu0 %v83
  %105 = vmatprep.subr.bf16.mxu0 0
  %106 = vmatpush1.bf16.msra.mxu0 %v84
  %107 = vmatprep.subr.bf16.mxu0 0
  %108 = vmatpush1.bf16.msra.mxu0 %v85
  %109 = vmatprep.subr.bf16.mxu0 0
  %110 = vmatpush1.bf16.msra.mxu0 %v86
  %111 = vmatprep.subr.bf16.mxu0 0
  %112 = vmatpush1.bf16.msra.mxu0 0
  %113 = vmatprep.subr.bf16.mxu0 0
  %114 = vmatpush1.bf16.msra.mxu0 0
  %115 = vmatprep.subr.bf16.mxu0 0
  %116 = vmatpush1.bf16.msra.mxu0 0
  %117 = vmatprep.subr.bf16.mxu0 0
  %118 = vmatpush1.bf16.msra.mxu0 0
  %119 = vmatprep.subr.bf16.mxu0 0
  %120 = vmatpush1.bf16.msra.mxu0 0
  %121 = vmatprep.subr.bf16.mxu0 0
  %122 = vmatpush1.bf16.msra.mxu0 0
  %123 = vmatprep.subr.bf16.mxu0 0
  %124 = vmatpush1.bf16.msra.mxu0 0
  %125 = vmatprep.subr.bf16.mxu0 0
  %126 = vmatpush1.bf16.msra.mxu0 0
  %127 = vmatprep.mubr.bf16.mxu0 0
  %128 = vmatmul.mubr.bf16.gmra.mrb[0].mxu0 %v45
  %v129 = vpop.f32.mrb[0].mxu0
  %v130 = vadd.f32 0.0, %v129
  %v131 = vpop.f32.mrb[0].mxu0
  %v132 = vpop.f32.mrb[0].mxu0
  %v133 = vadd.f32 0.0, %v132
  %v134 = vpop.f32.mrb[0].mxu0
  %135 = vdwg.mxu0
  %v136 = vpack.c.bf16 %v133, %v130
  %v137 = vld [vmem:[%s4] sm:$0x1]
  %v138 = vlaneseq
  %v139 = vshrl.u32 %v138, 7
  %v140 = vsub.s32 0, %v139
  %v141 = vrot.slane %v137, %v140
  %v144 = vunpack.c.l.b16 %v23
  %v145 = vunpack.c.l.b16 %v24
  %v146 = vpack.c.b16 %v145, %v144
  %vm147 = vcmask 130048
  %v149 = vsel %vm147, %v146, 0
  %151 = vmatprep.subr.bf16.mxu0 0
  %152 = vmatpush1.bf16.msra.mxu0 %v136
  %153 = vmatprep.subr.bf16.mxu0 0
  %154 = vmatpush1.bf16.msra.mxu0 0
  %155 = vmatprep.subr.bf16.mxu0 0
  %156 = vmatpush1.bf16.msra.mxu0 0
  %157 = vmatprep.subr.bf16.mxu0 0
  %158 = vmatpush1.bf16.msra.mxu0 0
  %159 = vmatprep.subr.bf16.mxu0 0
  %160 = vmatpush1.bf16.msra.mxu0 0
  %161 = vmatprep.subr.bf16.mxu0 0
  %162 = vmatpush1.bf16.msra.mxu0 0
  %163 = vmatprep.subr.bf16.mxu0 0
  %164 = vmatpush1.bf16.msra.mxu0 0
  %165 = vmatprep.subr.bf16.mxu0 0
  %166 = vmatpush1.bf16.msra.mxu0 0
  %167 = vmatprep.subr.bf16.mxu0 0
  %168 = vmatpush1.bf16.msra.mxu0 0
  %169 = vmatprep.subr.bf16.mxu0 0
  %170 = vmatpush1.bf16.msra.mxu0 0
  %171 = vmatprep.subr.bf16.mxu0 0
  %172 = vmatpush1.bf16.msra.mxu0 0
  %173 = vmatprep.subr.bf16.mxu0 0
  %174 = vmatpush1.bf16.msra.mxu0 0
  %175 = vmatprep.subr.bf16.mxu0 0
  %176 = vmatpush1.bf16.msra.mxu0 0
  %177 = vmatprep.subr.bf16.mxu0 0
  %178 = vmatpush1.bf16.msra.mxu0 0
  %179 = vmatprep.subr.bf16.mxu0 0
  %180 = vmatpush1.bf16.msra.mxu0 0
  %181 = vmatprep.subr.bf16.mxu0 0
  %182 = vmatpush1.bf16.msra.mxu0 0
  %183 = vmatprep.mubr.bf16.mxu0 0
  %184 = vmatmul.mubr.bf16.gmra.mrb[0].mxu0 %v149
  %v185 = vpop.f32.mrb[0].mxu0
  %v186 = vadd.f32 %v141, %v185
  %v187 = vpop.f32.mrb[0].mxu0
  %v188 = vpop.f32.mrb[0].mxu0
  %v189 = vadd.f32 %v141, %v188
  %v190 = vpop.f32.mrb[0].mxu0
  %191 = vdwg.mxu0
  %v192 = vmax.f32 %v186, 0.0
  %v193 = vmax.f32 %v189, 0.0
  %v194 = vpack.c.bf16 %v193, %v192
  %s195 = scalar_lea.vmem %s3, 64
  %v196 = vld [vmem:[%s195] sm:$0xf]
  %v197 = vld [vmem:[%s195 + $0x4] sm:$0xf]
  %v198 = vld [vmem:[%s195 + $0x8] sm:$0xf]
  %v199 = vld [vmem:[%s195 + $0xc] sm:$0xf]
  %v200 = vld [vmem:[%s195 + $0x10] sm:$0xf]
  %v201 = vld [vmem:[%s195 + $0x14] sm:$0xf]
  %v202 = vld [vmem:[%s195 + $0x18] sm:$0xf]
  %v203 = vld [vmem:[%s195 + $0x1c] sm:$0xf]
  %v204 = vld [vmem:[%s195 + $0x20] sm:$0xf]
  %v205 = vld [vmem:[%s195 + $0x24] sm:$0xf]
  %v206 = vld [vmem:[%s195 + $0x28] sm:$0xf]
  %v207 = vld [vmem:[%s195 + $0x2c] sm:$0xf]
  %v208 = vld [vmem:[%s195 + $0x30] sm:$0xf]
  %v209 = vld [vmem:[%s195 + $0x34] sm:$0xf]
  %v210 = vld [vmem:[%s195 + $0x38] sm:$0xf]
  %v211 = vld [vmem:[%s195 + $0x3c] sm:$0xf]
  %v228 = vunpack.c.l.b16 %v196
  %v229 = vunpack.c.l.b16 %v197
  %v230 = vunpack.c.l.b16 %v198
  %v231 = vunpack.c.l.b16 %v199
  %v232 = vunpack.c.l.b16 %v200
  %v233 = vunpack.c.l.b16 %v201
  %v234 = vunpack.c.l.b16 %v202
  %v235 = vunpack.c.l.b16 %v203
  %v236 = vunpack.c.l.b16 %v204
  %v237 = vunpack.c.l.b16 %v205
  %v238 = vunpack.c.l.b16 %v206
  %v239 = vunpack.c.l.b16 %v207
  %v240 = vunpack.c.l.b16 %v208
  %v241 = vunpack.c.l.b16 %v209
  %v242 = vunpack.c.l.b16 %v210
  %v243 = vunpack.c.l.b16 %v211
  %v244 = vpack.c.b16 %v229, %v228
  %v245 = vpack.c.b16 %v231, %v230
  %v246 = vpack.c.b16 %v233, %v232
  %v247 = vpack.c.b16 %v235, %v234
  %v248 = vpack.c.b16 %v237, %v236
  %v249 = vpack.c.b16 %v239, %v238
  %v250 = vpack.c.b16 %v241, %v240
  %v251 = vpack.c.b16 %v243, %v242
  %260 = vmatprep.subr.bf16.mxu0 0
  %261 = vmatpush1.bf16.msra.mxu0 %v244
  %262 = vmatprep.subr.bf16.mxu0 0
  %263 = vmatpush1.bf16.msra.mxu0 %v245
  %264 = vmatprep.subr.bf16.mxu0 0
  %265 = vmatpush1.bf16.msra.mxu0 %v246
  %266 = vmatprep.subr.bf16.mxu0 0
  %267 = vmatpush1.bf16.msra.mxu0 %v247
  %268 = vmatprep.subr.bf16.mxu0 0
  %269 = vmatpush1.bf16.msra.mxu0 %v248
  %270 = vmatprep.subr.bf16.mxu0 0
  %271 = vmatpush1.bf16.msra.mxu0 %v249
  %272 = vmatprep.subr.bf16.mxu0 0
  %273 = vmatpush1.bf16.msra.mxu0 %v250
  %274 = vmatprep.subr.bf16.mxu0 0
  %275 = vmatpush1.bf16.msra.mxu0 %v251
  %276 = vmatprep.subr.bf16.mxu0 0
  %277 = vmatpush1.bf16.msra.mxu0 0
  %278 = vmatprep.subr.bf16.mxu0 0
  %279 = vmatpush1.bf16.msra.mxu0 0
  %280 = vmatprep.subr.bf16.mxu0 0
  %281 = vmatpush1.bf16.msra.mxu0 0
  %282 = vmatprep.subr.bf16.mxu0 0
  %283 = vmatpush1.bf16.msra.mxu0 0
  %284 = vmatprep.subr.bf16.mxu0 0
  %285 = vmatpush1.bf16.msra.mxu0 0
  %286 = vmatprep.subr.bf16.mxu0 0
  %287 = vmatpush1.bf16.msra.mxu0 0
  %288 = vmatprep.subr.bf16.mxu0 0
  %289 = vmatpush1.bf16.msra.mxu0 0
  %290 = vmatprep.subr.bf16.mxu0 0
  %291 = vmatpush1.bf16.msra.mxu0 0
  %292 = vmatprep.mubr.bf16.mxu0 0
  %293 = vmatmul.mubr.bf16.gmra.mrb[0].mxu0 %v194
  %v294 = vpop.f32.mrb[0].mxu0
  %v295 = vadd.f32 0.0, %v294
  %v296 = vpop.f32.mrb[0].mxu0
  %v297 = vpop.f32.mrb[0].mxu0
  %v298 = vadd.f32 0.0, %v297
  %v299 = vpop.f32.mrb[0].mxu0
  %300 = vdwg.mxu0
  %v301 = vpack.c.bf16 %v298, %v295
  %v302 = vld [vmem:[%s4 + $0x1] sm:$0x1]
  %v303 = vlaneseq
  %v304 = vshrl.u32 %v303, 7
  %v305 = vsub.s32 0, %v304
  %v306 = vrot.slane %v302, %v305
  %307 = vmatprep.subr.bf16.mxu0 0
  %308 = vmatpush1.bf16.msra.mxu0 %v301
  %309 = vmatprep.subr.bf16.mxu0 0
  %310 = vmatpush1.bf16.msra.mxu0 0
  %311 = vmatprep.subr.bf16.mxu0 0
  %312 = vmatpush1.bf16.msra.mxu0 0
  %313 = vmatprep.subr.bf16.mxu0 0
  %314 = vmatpush1.bf16.msra.mxu0 0
  %315 = vmatprep.subr.bf16.mxu0 0
  %316 = vmatpush1.bf16.msra.mxu0 0
  %317 = vmatprep.subr.bf16.mxu0 0
  %318 = vmatpush1.bf16.msra.mxu0 0
  %319 = vmatprep.subr.bf16.mxu0 0
  %320 = vmatpush1.bf16.msra.mxu0 0
  %321 = vmatprep.subr.bf16.mxu0 0
  %322 = vmatpush1.bf16.msra.mxu0 0
  %323 = vmatprep.subr.bf16.mxu0 0
  %324 = vmatpush1.bf16.msra.mxu0 0
  %325 = vmatprep.subr.bf16.mxu0 0
  %326 = vmatpush1.bf16.msra.mxu0 0
  %327 = vmatprep.subr.bf16.mxu0 0
  %328 = vmatpush1.bf16.msra.mxu0 0
  %329 = vmatprep.subr.bf16.mxu0 0
  %330 = vmatpush1.bf16.msra.mxu0 0
  %331 = vmatprep.subr.bf16.mxu0 0
  %332 = vmatpush1.bf16.msra.mxu0 0
  %333 = vmatprep.subr.bf16.mxu0 0
  %334 = vmatpush1.bf16.msra.mxu0 0
  %335 = vmatprep.subr.bf16.mxu0 0
  %336 = vmatpush1.bf16.msra.mxu0 0
  %337 = vmatprep.subr.bf16.mxu0 0
  %338 = vmatpush1.bf16.msra.mxu0 0
  %339 = vmatprep.mubr.bf16.mxu0 0
  %340 = vmatmul.mubr.bf16.gmra.mrb[0].mxu0 %v149
  %v341 = vpop.f32.mrb[0].mxu0
  %v342 = vadd.f32 %v306, %v341
  %v343 = vpop.f32.mrb[0].mxu0
  %v344 = vpop.f32.mrb[0].mxu0
  %v345 = vadd.f32 %v306, %v344
  %v346 = vpop.f32.mrb[0].mxu0
  %347 = vdwg.mxu0
  %v348 = vmax.f32 %v342, 0.0
  %v349 = vmax.f32 %v345, 0.0
  %v350 = vpack.c.bf16 %v349, %v348
  %s351 = scalar_lea.vmem %s3, 128
  %v352 = vld [vmem:[%s351] sm:$0xf]
  %v353 = vld [vmem:[%s351 + $0x4] sm:$0xf]
  %v354 = vld [vmem:[%s351 + $0x8] sm:$0xf]
  %v355 = vld [vmem:[%s351 + $0xc] sm:$0xf]
  %v356 = vld [vmem:[%s351 + $0x10] sm:$0xf]
  %v357 = vld [vmem:[%s351 + $0x14] sm:$0xf]
  %v358 = vld [vmem:[%s351 + $0x18] sm:$0xf]
  %v359 = vld [vmem:[%s351 + $0x1c] sm:$0xf]
  %v360 = vld [vmem:[%s351 + $0x20] sm:$0xf]
  %v361 = vld [vmem:[%s351 + $0x24] sm:$0xf]
  %v362 = vld [vmem:[%s351 + $0x28] sm:$0xf]
  %v363 = vld [vmem:[%s351 + $0x2c] sm:$0xf]
  %v364 = vld [vmem:[%s351 + $0x30] sm:$0xf]
  %v365 = vld [vmem:[%s351 + $0x34] sm:$0xf]
  %v366 = vld [vmem:[%s351 + $0x38] sm:$0xf]
  %v367 = vld [vmem:[%s351 + $0x3c] sm:$0xf]
  %v384 = vunpack.c.l.b16 %v352
  %v385 = vunpack.c.l.b16 %v353
  %v386 = vunpack.c.l.b16 %v354
  %v387 = vunpack.c.l.b16 %v355
  %v388 = vunpack.c.l.b16 %v356
  %v389 = vunpack.c.l.b16 %v357
  %v390 = vunpack.c.l.b16 %v358
  %v391 = vunpack.c.l.b16 %v359
  %v392 = vunpack.c.l.b16 %v360
  %v393 = vunpack.c.l.b16 %v361
  %v394 = vunpack.c.l.b16 %v362
  %v395 = vunpack.c.l.b16 %v363
  %v396 = vunpack.c.l.b16 %v364
  %v397 = vunpack.c.l.b16 %v365
  %v398 = vunpack.c.l.b16 %v366
  %v399 = vunpack.c.l.b16 %v367
  %v400 = vpack.c.b16 %v385, %v384
  %v401 = vpack.c.b16 %v387, %v386
  %v402 = vpack.c.b16 %v389, %v388
  %v403 = vpack.c.b16 %v391, %v390
  %v404 = vpack.c.b16 %v393, %v392
  %v405 = vpack.c.b16 %v395, %v394
  %v406 = vpack.c.b16 %v397, %v396
  %v407 = vpack.c.b16 %v399, %v398
  %416 = vmatprep.subr.bf16.mxu0 0
  %417 = vmatpush1.bf16.msra.mxu0 %v400
  %418 = vmatprep.subr.bf16.mxu0 0
  %419 = vmatpush1.bf16.msra.mxu0 %v401
  %420 = vmatprep.subr.bf16.mxu0 0
  %421 = vmatpush1.bf16.msra.mxu0 %v402
  %422 = vmatprep.subr.bf16.mxu0 0
  %423 = vmatpush1.bf16.msra.mxu0 %v403
  %424 = vmatprep.subr.bf16.mxu0 0
  %425 = vmatpush1.bf16.msra.mxu0 %v404
  %426 = vmatprep.subr.bf16.mxu0 0
  %427 = vmatpush1.bf16.msra.mxu0 %v405
  %428 = vmatprep.subr.bf16.mxu0 0
  %429 = vmatpush1.bf16.msra.mxu0 %v406
  %430 = vmatprep.subr.bf16.mxu0 0
  %431 = vmatpush1.bf16.msra.mxu0 %v407
  %432 = vmatprep.subr.bf16.mxu0 0
  %433 = vmatpush1.bf16.msra.mxu0 0
  %434 = vmatprep.subr.bf16.mxu0 0
  %435 = vmatpush1.bf16.msra.mxu0 0
  %436 = vmatprep.subr.bf16.mxu0 0
  %437 = vmatpush1.bf16.msra.mxu0 0
  %438 = vmatprep.subr.bf16.mxu0 0
  %439 = vmatpush1.bf16.msra.mxu0 0
  %440 = vmatprep.subr.bf16.mxu0 0
  %441 = vmatpush1.bf16.msra.mxu0 0
  %442 = vmatprep.subr.bf16.mxu0 0
  %443 = vmatpush1.bf16.msra.mxu0 0
  %444 = vmatprep.subr.bf16.mxu0 0
  %445 = vmatpush1.bf16.msra.mxu0 0
  %446 = vmatprep.subr.bf16.mxu0 0
  %447 = vmatpush1.bf16.msra.mxu0 0
  %448 = vmatprep.mubr.bf16.mxu0 0
  %449 = vmatmul.mubr.bf16.gmra.mrb[0].mxu0 %v350
  %v450 = vpop.f32.mrb[0].mxu0
  %v451 = vadd.f32 0.0, %v450
  %v452 = vpop.f32.mrb[0].mxu0
  %v453 = vpop.f32.mrb[0].mxu0
  %v454 = vadd.f32 0.0, %v453
  %v455 = vpop.f32.mrb[0].mxu0
  %456 = vdwg.mxu0
  %v457 = vpack.c.bf16 %v454, %v451
  %v458 = vld [vmem:[%s4 + $0x2] sm:$0x1]
  %v459 = vlaneseq
  %v460 = vshrl.u32 %v459, 7
  %v461 = vsub.s32 0, %v460
  %v462 = vrot.slane %v458, %v461
  %463 = vmatprep.subr.bf16.mxu0 0
  %464 = vmatpush1.bf16.msra.mxu0 %v457
  %465 = vmatprep.subr.bf16.mxu0 0
  %466 = vmatpush1.bf16.msra.mxu0 0
  %467 = vmatprep.subr.bf16.mxu0 0
  %468 = vmatpush1.bf16.msra.mxu0 0
  %469 = vmatprep.subr.bf16.mxu0 0
  %470 = vmatpush1.bf16.msra.mxu0 0
  %471 = vmatprep.subr.bf16.mxu0 0
  %472 = vmatpush1.bf16.msra.mxu0 0
  %473 = vmatprep.subr.bf16.mxu0 0
  %474 = vmatpush1.bf16.msra.mxu0 0
  %475 = vmatprep.subr.bf16.mxu0 0
  %476 = vmatpush1.bf16.msra.mxu0 0
  %477 = vmatprep.subr.bf16.mxu0 0
  %478 = vmatpush1.bf16.msra.mxu0 0
  %479 = vmatprep.subr.bf16.mxu0 0
  %480 = vmatpush1.bf16.msra.mxu0 0
  %481 = vmatprep.subr.bf16.mxu0 0
  %482 = vmatpush1.bf16.msra.mxu0 0
  %483 = vmatprep.subr.bf16.mxu0 0
  %484 = vmatpush1.bf16.msra.mxu0 0
  %485 = vmatprep.subr.bf16.mxu0 0
  %486 = vmatpush1.bf16.msra.mxu0 0
  %487 = vmatprep.subr.bf16.mxu0 0
  %488 = vmatpush1.bf16.msra.mxu0 0
  %489 = vmatprep.subr.bf16.mxu0 0
  %490 = vmatpush1.bf16.msra.mxu0 0
  %491 = vmatprep.subr.bf16.mxu0 0
  %492 = vmatpush1.bf16.msra.mxu0 0
  %493 = vmatprep.subr.bf16.mxu0 0
  %494 = vmatpush1.bf16.msra.mxu0 0
  %495 = vmatprep.mubr.bf16.mxu0 0
  %496 = vmatmul.mubr.bf16.gmra.mrb[0].mxu0 %v149
  %v497 = vpop.f32.mrb[0].mxu0
  %v498 = vadd.f32 %v462, %v497
  %v499 = vpop.f32.mrb[0].mxu0
  %v500 = vpop.f32.mrb[0].mxu0
  %v501 = vadd.f32 %v462, %v500
  %v502 = vpop.f32.mrb[0].mxu0
  %503 = vdwg.mxu0
  %v504 = vmax.f32 %v498, 0.0
  %v505 = vmax.f32 %v501, 0.0
  %v506 = vpack.c.bf16 %v505, %v504
  %s507 = scalar_lea.vmem %s3, 192
  %v508 = vld [vmem:[%s507] sm:$0xf]
  %v509 = vld [vmem:[%s507 + $0x4] sm:$0xf]
  %v510 = vld [vmem:[%s507 + $0x8] sm:$0xf]
  %v511 = vld [vmem:[%s507 + $0xc] sm:$0xf]
  %v512 = vld [vmem:[%s507 + $0x10] sm:$0xf]
  %v513 = vld [vmem:[%s507 + $0x14] sm:$0xf]
  %v514 = vld [vmem:[%s507 + $0x18] sm:$0xf]
  %v515 = vld [vmem:[%s507 + $0x1c] sm:$0xf]
  %v516 = vld [vmem:[%s507 + $0x20] sm:$0xf]
  %v517 = vld [vmem:[%s507 + $0x24] sm:$0xf]
  %v518 = vld [vmem:[%s507 + $0x28] sm:$0xf]
  %v519 = vld [vmem:[%s507 + $0x2c] sm:$0xf]
  %v520 = vld [vmem:[%s507 + $0x30] sm:$0xf]
  %v521 = vld [vmem:[%s507 + $0x34] sm:$0xf]
  %v522 = vld [vmem:[%s507 + $0x38] sm:$0xf]
  %v523 = vld [vmem:[%s507 + $0x3c] sm:$0xf]
  %v540 = vunpack.c.l.b16 %v508
  %v541 = vunpack.c.l.b16 %v509
  %v542 = vunpack.c.l.b16 %v510
  %v543 = vunpack.c.l.b16 %v511
  %v544 = vunpack.c.l.b16 %v512
  %v545 = vunpack.c.l.b16 %v513
  %v546 = vunpack.c.l.b16 %v514
  %v547 = vunpack.c.l.b16 %v515
  %v548 = vunpack.c.l.b16 %v516
  %v549 = vunpack.c.l.b16 %v517
  %v550 = vunpack.c.l.b16 %v518
  %v551 = vunpack.c.l.b16 %v519
  %v552 = vunpack.c.l.b16 %v520
  %v553 = vunpack.c.l.b16 %v521
  %v554 = vunpack.c.l.b16 %v522
  %v555 = vunpack.c.l.b16 %v523
  %v556 = vpack.c.b16 %v541, %v540
  %v557 = vpack.c.b16 %v543, %v542
  %v558 = vpack.c.b16 %v545, %v544
  %v559 = vpack.c.b16 %v547, %v546
  %v560 = vpack.c.b16 %v549, %v548
  %v561 = vpack.c.b16 %v551, %v550
  %v562 = vpack.c.b16 %v553, %v552
  %v563 = vpack.c.b16 %v555, %v554
  %572 = vmatprep.subr.bf16.mxu0 0
  %573 = vmatpush1.bf16.msra.mxu0 %v556
  %574 = vmatprep.subr.bf16.mxu0 0
  %575 = vmatpush1.bf16.msra.mxu0 %v557
  %576 = vmatprep.subr.bf16.mxu0 0
  %577 = vmatpush1.bf16.msra.mxu0 %v558
  %578 = vmatprep.subr.bf16.mxu0 0
  %579 = vmatpush1.bf16.msra.mxu0 %v559
  %580 = vmatprep.subr.bf16.mxu0 0
  %581 = vmatpush1.bf16.msra.mxu0 %v560
  %582 = vmatprep.subr.bf16.mxu0 0
  %583 = vmatpush1.bf16.msra.mxu0 %v561
  %584 = vmatprep.subr.bf16.mxu0 0
  %585 = vmatpush1.bf16.msra.mxu0 %v562
  %586 = vmatprep.subr.bf16.mxu0 0
  %587 = vmatpush1.bf16.msra.mxu0 %v563
  %588 = vmatprep.subr.bf16.mxu0 0
  %589 = vmatpush1.bf16.msra.mxu0 0
  %590 = vmatprep.subr.bf16.mxu0 0
  %591 = vmatpush1.bf16.msra.mxu0 0
  %592 = vmatprep.subr.bf16.mxu0 0
  %593 = vmatpush1.bf16.msra.mxu0 0
  %594 = vmatprep.subr.bf16.mxu0 0
  %595 = vmatpush1.bf16.msra.mxu0 0
  %596 = vmatprep.subr.bf16.mxu0 0
  %597 = vmatpush1.bf16.msra.mxu0 0
  %598 = vmatprep.subr.bf16.mxu0 0
  %599 = vmatpush1.bf16.msra.mxu0 0
  %600 = vmatprep.subr.bf16.mxu0 0
  %601 = vmatpush1.bf16.msra.mxu0 0
  %602 = vmatprep.subr.bf16.mxu0 0
  %603 = vmatpush1.bf16.msra.mxu0 0
  %604 = vmatprep.mubr.bf16.mxu0 0
  %605 = vmatmul.mubr.bf16.gmra.mrb[0].mxu0 %v506
  %v606 = vpop.f32.mrb[0].mxu0
  %v607 = vadd.f32 0.0, %v606
  %v608 = vpop.f32.mrb[0].mxu0
  %v609 = vpop.f32.mrb[0].mxu0
  %v610 = vadd.f32 0.0, %v609
  %v611 = vpop.f32.mrb[0].mxu0
  %612 = vdwg.mxu0
  %v613 = vld [vmem:[%s2] sm:$0xf]
  %v614 = vpack.c.bf16 %v610, %v607
  %v615 = vld [vmem:[%s4 + $0x3] sm:$0x1]
  %v616 = vlaneseq
  %v617 = vshrl.u32 %v616, 7
  %v618 = vsub.s32 0, %v617
  %v619 = vrot.slane %v615, %v618
  %v621 = vsel %vm147, %v613, 0
  %623 = vmatprep.subr.bf16.mxu0 0
  %624 = vmatpush1.bf16.msra.mxu0 %v614
  %625 = vmatprep.subr.bf16.mxu0 0
  %626 = vmatpush1.bf16.msra.mxu0 0
  %627 = vmatprep.subr.bf16.mxu0 0
  %628 = vmatpush1.bf16.msra.mxu0 0
  %629 = vmatprep.subr.bf16.mxu0 0
  %630 = vmatpush1.bf16.msra.mxu0 0
  %631 = vmatprep.subr.bf16.mxu0 0
  %632 = vmatpush1.bf16.msra.mxu0 0
  %633 = vmatprep.subr.bf16.mxu0 0
  %634 = vmatpush1.bf16.msra.mxu0 0
  %635 = vmatprep.subr.bf16.mxu0 0
  %636 = vmatpush1.bf16.msra.mxu0 0
  %637 = vmatprep.subr.bf16.mxu0 0
  %638 = vmatpush1.bf16.msra.mxu0 0
  %639 = vmatprep.subr.bf16.mxu0 0
  %640 = vmatpush1.bf16.msra.mxu0 0
  %641 = vmatprep.subr.bf16.mxu0 0
  %642 = vmatpush1.bf16.msra.mxu0 0
  %643 = vmatprep.subr.bf16.mxu0 0
  %644 = vmatpush1.bf16.msra.mxu0 0
  %645 = vmatprep.subr.bf16.mxu0 0
  %646 = vmatpush1.bf16.msra.mxu0 0
  %647 = vmatprep.subr.bf16.mxu0 0
  %648 = vmatpush1.bf16.msra.mxu0 0
  %649 = vmatprep.subr.bf16.mxu0 0
  %650 = vmatpush1.bf16.msra.mxu0 0
  %651 = vmatprep.subr.bf16.mxu0 0
  %652 = vmatpush1.bf16.msra.mxu0 0
  %653 = vmatprep.subr.bf16.mxu0 0
  %654 = vmatpush1.bf16.msra.mxu0 0
  %655 = vmatprep.mubr.bf16.mxu0 0
  %656 = vmatmul.mubr.bf16.gmra.mrb[0].mxu0 %v621
  %v657 = vpop.f32.mrb[0].mxu0
  %v658 = vadd.f32 %v619, %v657
  %v659 = vpop.f32.mrb[0].mxu0
  %v660 = vpop.f32.mrb[0].mxu0
  %v661 = vpop.f32.mrb[0].mxu0
  %662 = vdwg.mxu0
  %v663 = vmax.f32 %v658, 0.0
  %v664 = vpack.c.bf16 %v663, %v663
  %s665 = scalar_lea.vmem %s3, 256
  %v666 = vld [vmem:[%s665] sm:$0xf]
  %v667 = vld [vmem:[%s665 + $0x4] sm:$0xf]
  %v668 = vld [vmem:[%s665 + $0x8] sm:$0xf]
  %v669 = vld [vmem:[%s665 + $0xc] sm:$0xf]
  %v670 = vld [vmem:[%s665 + $0x10] sm:$0xf]
  %v671 = vld [vmem:[%s665 + $0x14] sm:$0xf]
  %v672 = vld [vmem:[%s665 + $0x18] sm:$0xf]
  %v673 = vld [vmem:[%s665 + $0x1c] sm:$0xf]
  %v674 = vld [vmem:[%s665 + $0x20] sm:$0xf]
  %v675 = vld [vmem:[%s665 + $0x24] sm:$0xf]
  %v676 = vld [vmem:[%s665 + $0x28] sm:$0xf]
  %v677 = vld [vmem:[%s665 + $0x2c] sm:$0xf]
  %v678 = vld [vmem:[%s665 + $0x30] sm:$0xf]
  %v679 = vld [vmem:[%s665 + $0x34] sm:$0xf]
  %v680 = vld [vmem:[%s665 + $0x38] sm:$0xf]
  %v681 = vld [vmem:[%s665 + $0x3c] sm:$0xf]
  %v682 = vld [vmem:[%s4 + $0x4] sm:$0x1]
  %v683 = vlaneseq
  %v684 = vshrl.u32 %v683, 7
  %v685 = vsub.s32 0, %v684
  %v686 = vrot.slane %v682, %v685
  %v703 = vunpack.c.l.b16 %v666
  %v704 = vunpack.c.l.b16 %v667
  %v705 = vunpack.c.l.b16 %v668
  %v706 = vunpack.c.l.b16 %v669
  %v707 = vunpack.c.l.b16 %v670
  %v708 = vunpack.c.l.b16 %v671
  %v709 = vunpack.c.l.b16 %v672
  %v710 = vunpack.c.l.b16 %v673
  %v711 = vunpack.c.l.b16 %v674
  %v712 = vunpack.c.l.b16 %v675
  %v713 = vunpack.c.l.b16 %v676
  %v714 = vunpack.c.l.b16 %v677
  %v715 = vunpack.c.l.b16 %v678
  %v716 = vunpack.c.l.b16 %v679
  %v717 = vunpack.c.l.b16 %v680
  %v718 = vunpack.c.l.b16 %v681
  %v719 = vpack.c.b16 %v704, %v703
  %v720 = vpack.c.b16 %v706, %v705
  %v721 = vpack.c.b16 %v708, %v707
  %v722 = vpack.c.b16 %v710, %v709
  %v723 = vpack.c.b16 %v712, %v711
  %v724 = vpack.c.b16 %v714, %v713
  %v725 = vpack.c.b16 %v716, %v715
  %v726 = vpack.c.b16 %v718, %v717
  %735 = vmatprep.subr.bf16.mxu0 0
  %736 = vmatpush1.bf16.msra.mxu0 %v719
  %737 = vmatprep.subr.bf16.mxu0 0
  %738 = vmatpush1.bf16.msra.mxu0 %v720
  %739 = vmatprep.subr.bf16.mxu0 0
  %740 = vmatpush1.bf16.msra.mxu0 %v721
  %741 = vmatprep.subr.bf16.mxu0 0
  %742 = vmatpush1.bf16.msra.mxu0 %v722
  %743 = vmatprep.subr.bf16.mxu0 0
  %744 = vmatpush1.bf16.msra.mxu0 %v723
  %745 = vmatprep.subr.bf16.mxu0 0
  %746 = vmatpush1.bf16.msra.mxu0 %v724
  %747 = vmatprep.subr.bf16.mxu0 0
  %748 = vmatpush1.bf16.msra.mxu0 %v725
  %749 = vmatprep.subr.bf16.mxu0 0
  %750 = vmatpush1.bf16.msra.mxu0 %v726
  %751 = vmatprep.subr.bf16.mxu0 0
  %752 = vmatpush1.bf16.msra.mxu0 0
  %753 = vmatprep.subr.bf16.mxu0 0
  %754 = vmatpush1.bf16.msra.mxu0 0
  %755 = vmatprep.subr.bf16.mxu0 0
  %756 = vmatpush1.bf16.msra.mxu0 0
  %757 = vmatprep.subr.bf16.mxu0 0
  %758 = vmatpush1.bf16.msra.mxu0 0
  %759 = vmatprep.subr.bf16.mxu0 0
  %760 = vmatpush1.bf16.msra.mxu0 0
  %761 = vmatprep.subr.bf16.mxu0 0
  %762 = vmatpush1.bf16.msra.mxu0 0
  %763 = vmatprep.subr.bf16.mxu0 0
  %764 = vmatpush1.bf16.msra.mxu0 0
  %765 = vmatprep.subr.bf16.mxu0 0
  %766 = vmatpush1.bf16.msra.mxu0 0
  %767 = vmatprep.mubr.bf16.mxu0 0
  %768 = vmatmul.mubr.bf16.gmra.mrb[0].mxu0 %v664
  %v769 = vpop.f32.mrb[0].mxu0
  %v770 = vadd.f32 %v686, %v769
  %v771 = vpop.f32.mrb[0].mxu0
  %v772 = vpop.f32.mrb[0].mxu0
  %v773 = vpop.f32.mrb[0].mxu0
  %774 = vdwg.mxu0
  %v775 = vmax.f32 %v770, 0.0
  %v776 = vpack.c.bf16 %v775, %v775
  %s777 = scalar_lea.vmem %s3, 320
  %v778 = vld [vmem:[%s777] sm:$0xf]
  %v779 = vld [vmem:[%s777 + $0x4] sm:$0xf]
  %v780 = vld [vmem:[%s777 + $0x8] sm:$0xf]
  %v781 = vld [vmem:[%s777 + $0xc] sm:$0xf]
  %v782 = vld [vmem:[%s777 + $0x10] sm:$0xf]
  %v783 = vld [vmem:[%s777 + $0x14] sm:$0xf]
  %v784 = vld [vmem:[%s777 + $0x18] sm:$0xf]
  %v785 = vld [vmem:[%s777 + $0x1c] sm:$0xf]
  %v786 = vld [vmem:[%s777 + $0x20] sm:$0xf]
  %v787 = vld [vmem:[%s777 + $0x24] sm:$0xf]
  %v788 = vld [vmem:[%s777 + $0x28] sm:$0xf]
  %v789 = vld [vmem:[%s777 + $0x2c] sm:$0xf]
  %v790 = vld [vmem:[%s777 + $0x30] sm:$0xf]
  %v791 = vld [vmem:[%s777 + $0x34] sm:$0xf]
  %v792 = vld [vmem:[%s777 + $0x38] sm:$0xf]
  %v793 = vld [vmem:[%s777 + $0x3c] sm:$0xf]
  %v794 = vld [vmem:[%s4 + $0x5] sm:$0x1]
  %v795 = vlaneseq
  %v796 = vshrl.u32 %v795, 7
  %v797 = vsub.s32 0, %v796
  %v798 = vrot.slane %v794, %v797
  %v815 = vunpack.c.l.b16 %v778
  %v816 = vunpack.c.l.b16 %v779
  %v817 = vunpack.c.l.b16 %v780
  %v818 = vunpack.c.l.b16 %v781
  %v819 = vunpack.c.l.b16 %v782
  %v820 = vunpack.c.l.b16 %v783
  %v821 = vunpack.c.l.b16 %v784
  %v822 = vunpack.c.l.b16 %v785
  %v823 = vunpack.c.l.b16 %v786
  %v824 = vunpack.c.l.b16 %v787
  %v825 = vunpack.c.l.b16 %v788
  %v826 = vunpack.c.l.b16 %v789
  %v827 = vunpack.c.l.b16 %v790
  %v828 = vunpack.c.l.b16 %v791
  %v829 = vunpack.c.l.b16 %v792
  %v830 = vunpack.c.l.b16 %v793
  %v831 = vpack.c.b16 %v816, %v815
  %v832 = vpack.c.b16 %v818, %v817
  %v833 = vpack.c.b16 %v820, %v819
  %v834 = vpack.c.b16 %v822, %v821
  %v835 = vpack.c.b16 %v824, %v823
  %v836 = vpack.c.b16 %v826, %v825
  %v837 = vpack.c.b16 %v828, %v827
  %v838 = vpack.c.b16 %v830, %v829
  %847 = vmatprep.subr.bf16.mxu0 0
  %848 = vmatpush1.bf16.msra.mxu0 %v831
  %849 = vmatprep.subr.bf16.mxu0 0
  %850 = vmatpush1.bf16.msra.mxu0 %v832
  %851 = vmatprep.subr.bf16.mxu0 0
  %852 = vmatpush1.bf16.msra.mxu0 %v833
  %853 = vmatprep.subr.bf16.mxu0 0
  %854 = vmatpush1.bf16.msra.mxu0 %v834
  %855 = vmatprep.subr.bf16.mxu0 0
  %856 = vmatpush1.bf16.msra.mxu0 %v835
  %857 = vmatprep.subr.bf16.mxu0 0
  %858 = vmatpush1.bf16.msra.mxu0 %v836
  %859 = vmatprep.subr.bf16.mxu0 0
  %860 = vmatpush1.bf16.msra.mxu0 %v837
  %861 = vmatprep.subr.bf16.mxu0 0
  %862 = vmatpush1.bf16.msra.mxu0 %v838
  %863 = vmatprep.subr.bf16.mxu0 0
  %864 = vmatpush1.bf16.msra.mxu0 0
  %865 = vmatprep.subr.bf16.mxu0 0
  %866 = vmatpush1.bf16.msra.mxu0 0
  %867 = vmatprep.subr.bf16.mxu0 0
  %868 = vmatpush1.bf16.msra.mxu0 0
  %869 = vmatprep.subr.bf16.mxu0 0
  %870 = vmatpush1.bf16.msra.mxu0 0
  %871 = vmatprep.subr.bf16.mxu0 0
  %872 = vmatpush1.bf16.msra.mxu0 0
  %873 = vmatprep.subr.bf16.mxu0 0
  %874 = vmatpush1.bf16.msra.mxu0 0
  %875 = vmatprep.subr.bf16.mxu0 0
  %876 = vmatpush1.bf16.msra.mxu0 0
  %877 = vmatprep.subr.bf16.mxu0 0
  %878 = vmatpush1.bf16.msra.mxu0 0
  %879 = vmatprep.mubr.bf16.mxu0 0
  %880 = vmatmul.mubr.bf16.gmra.mrb[0].mxu0 %v776
  %v881 = vpop.f32.mrb[0].mxu0
  %v882 = vadd.f32 %v798, %v881
  %v883 = vpop.f32.mrb[0].mxu0
  %v884 = vpop.f32.mrb[0].mxu0
  %v885 = vpop.f32.mrb[0].mxu0
  %886 = vdwg.mxu0
  %v887 = vmax.f32 %v882, 0.0
  %v888 = vpack.c.bf16 %v887, %v887
  %s889 = scalar_lea.vmem %s3, 384
  %v890 = vld [vmem:[%s889] sm:$0xf]
  %v891 = vld [vmem:[%s889 + $0x4] sm:$0xf]
  %v892 = vld [vmem:[%s889 + $0x8] sm:$0xf]
  %v893 = vld [vmem:[%s889 + $0xc] sm:$0xf]
  %v894 = vld [vmem:[%s889 + $0x10] sm:$0xf]
  %v895 = vld [vmem:[%s889 + $0x14] sm:$0xf]
  %v896 = vld [vmem:[%s889 + $0x18] sm:$0xf]
  %v897 = vld [vmem:[%s889 + $0x1c] sm:$0xf]
  %v898 = vld [vmem:[%s889 + $0x20] sm:$0xf]
  %v899 = vld [vmem:[%s889 + $0x24] sm:$0xf]
  %v900 = vld [vmem:[%s889 + $0x28] sm:$0xf]
  %v901 = vld [vmem:[%s889 + $0x2c] sm:$0xf]
  %v902 = vld [vmem:[%s889 + $0x30] sm:$0xf]
  %v903 = vld [vmem:[%s889 + $0x34] sm:$0xf]
  %v904 = vld [vmem:[%s889 + $0x38] sm:$0xf]
  %v905 = vld [vmem:[%s889 + $0x3c] sm:$0xf]
  %v906 = vld [vmem:[%s4 + $0x6] sm:$0x1]
  %v907 = vlaneseq
  %v908 = vshrl.u32 %v907, 7
  %v909 = vsub.s32 0, %v908
  %v910 = vrot.slane %v906, %v909
  %v927 = vunpack.c.l.b16 %v890
  %v928 = vunpack.c.l.b16 %v891
  %v929 = vunpack.c.l.b16 %v892
  %v930 = vunpack.c.l.b16 %v893
  %v931 = vunpack.c.l.b16 %v894
  %v932 = vunpack.c.l.b16 %v895
  %v933 = vunpack.c.l.b16 %v896
  %v934 = vunpack.c.l.b16 %v897
  %v935 = vunpack.c.l.b16 %v898
  %v936 = vunpack.c.l.b16 %v899
  %v937 = vunpack.c.l.b16 %v900
  %v938 = vunpack.c.l.b16 %v901
  %v939 = vunpack.c.l.b16 %v902
  %v940 = vunpack.c.l.b16 %v903
  %v941 = vunpack.c.l.b16 %v904
  %v942 = vunpack.c.l.b16 %v905
  %v943 = vpack.c.b16 %v928, %v927
  %v944 = vpack.c.b16 %v930, %v929
  %v945 = vpack.c.b16 %v932, %v931
  %v946 = vpack.c.b16 %v934, %v933
  %v947 = vpack.c.b16 %v936, %v935
  %v948 = vpack.c.b16 %v938, %v937
  %v949 = vpack.c.b16 %v940, %v939
  %v950 = vpack.c.b16 %v942, %v941
  %959 = vmatprep.subr.bf16.mxu0 0
  %960 = vmatpush1.bf16.msra.mxu0 %v943
  %961 = vmatprep.subr.bf16.mxu0 0
  %962 = vmatpush1.bf16.msra.mxu0 %v944
  %963 = vmatprep.subr.bf16.mxu0 0
  %964 = vmatpush1.bf16.msra.mxu0 %v945
  %965 = vmatprep.subr.bf16.mxu0 0
  %966 = vmatpush1.bf16.msra.mxu0 %v946
  %967 = vmatprep.subr.bf16.mxu0 0
  %968 = vmatpush1.bf16.msra.mxu0 %v947
  %969 = vmatprep.subr.bf16.mxu0 0
  %970 = vmatpush1.bf16.msra.mxu0 %v948
  %971 = vmatprep.subr.bf16.mxu0 0
  %972 = vmatpush1.bf16.msra.mxu0 %v949
  %973 = vmatprep.subr.bf16.mxu0 0
  %974 = vmatpush1.bf16.msra.mxu0 %v950
  %975 = vmatprep.subr.bf16.mxu0 0
  %976 = vmatpush1.bf16.msra.mxu0 0
  %977 = vmatprep.subr.bf16.mxu0 0
  %978 = vmatpush1.bf16.msra.mxu0 0
  %979 = vmatprep.subr.bf16.mxu0 0
  %980 = vmatpush1.bf16.msra.mxu0 0
  %981 = vmatprep.subr.bf16.mxu0 0
  %982 = vmatpush1.bf16.msra.mxu0 0
  %983 = vmatprep.subr.bf16.mxu0 0
  %984 = vmatpush1.bf16.msra.mxu0 0
  %985 = vmatprep.subr.bf16.mxu0 0
  %986 = vmatpush1.bf16.msra.mxu0 0
  %987 = vmatprep.subr.bf16.mxu0 0
  %988 = vmatpush1.bf16.msra.mxu0 0
  %989 = vmatprep.subr.bf16.mxu0 0
  %990 = vmatpush1.bf16.msra.mxu0 0
  %991 = vmatprep.mubr.bf16.mxu0 0
  %992 = vmatmul.mubr.bf16.gmra.mrb[0].mxu0 %v888
  %v993 = vpop.f32.mrb[0].mxu0
  %v994 = vadd.f32 %v910, %v993
  %v995 = vpop.f32.mrb[0].mxu0
  %v996 = vpop.f32.mrb[0].mxu0
  %v997 = vpop.f32.mrb[0].mxu0
  %998 = vdwg.mxu0
  %999 = vst [vmem:[%s5] sm:$0xff] %v994
  // Predicated region
  $region22: #{help_base_forward.1} parent=0 // pred_check
    _
  $region23: #{help_base_forward.1} parent=0 // pred_check_branch
    %1001 = sbr.rel (0) target = $region25
  $region24: #{help_base_forward.1} parent=0 // pred_region
    _
  $region25: #{help_base_forward.1} parent=0 // pred_fallthru
    _
  // Predicated region
  $region26: #{help_base_forward.1} parent=0 // pred_check
    _
  $region27: #{help_base_forward.1} parent=0 // pred_check_branch
    %1003 = sbr.rel (0) target = $region29
  $region28: #{help_base_forward.1} parent=0 // pred_region
    _
  $region29: #{help_base_forward.1} parent=0 // pred_fallthru
    _

</llo_original>
